<compile_context>
chip_gen: v7x
topology: tpu7x:2x2x1
jax: 0.10.0
libtpu: 0.0.40
codegen_flags: <defaults>
</compile_context>

<pallas_src>
import jax
import jax.numpy as jnp
from jax import lax
from jax.experimental import pallas as pl
from jax.experimental.pallas import tpu as pltpu


def _round_up(x, m):
    return ((x + m - 1) // m) * m


def _readout_kernel(w_ref, b_ref, x_ref, o_ref):
    # w_ref: (n_pad, F)  bf16  -- grid-invariant, VMEM-resident across steps
    # b_ref: (n_pad, 1)  f32   -- grid-invariant
    # x_ref: (F, bn)     f32   -- streamed over the batch (lane) axis
    # o_ref: (n_pad, bn) f32
    x = x_ref[...].astype(jnp.bfloat16)          # cast in-kernel: x read from HBM once, in f32
    acc = lax.dot_general(
        w_ref[...], x,
        dimension_numbers=(((1,), (0,)), ((), ())),   # native (M,K)x(K,N): no transposes anywhere
        preferred_element_type=jnp.float32)
    o_ref[...] = acc + b_ref[...]


def prepare_readout_params(weight, bias, n_pad_to=128):
    """One-time parameter prep (outside the hot forward).

    weight: (n_out, F) PyTorch nn.Linear layout.
    bias:   (n_out,)
    Returns (w_p bf16 (n_pad, F), b_p f32 (n_pad, 1), n_out).
    """
    n_out, F = weight.shape
    n_pad = _round_up(max(n_out, n_pad_to), 128)
    w_p = jnp.zeros((n_pad, F), jnp.bfloat16).at[:n_out, :].set(
        weight.astype(jnp.bfloat16))
    b_p = jnp.zeros((n_pad, 1), jnp.float32).at[:n_out, 0].set(
        bias.astype(jnp.float32))
    return w_p, b_p, n_out


def _choose_batch_tile(B):
    """Lane-axis (batch) tile.  Tiny batches: one full block (latency bound).
    Real batches: 512-1024 lanes, lane-aligned, and >= 2 grid steps so the
    "parallel" axis can shard across v7x's two TensorCores."""
    if B <= 256:
        return B
    return min(1024, _round_up(pl.cdiv(B, 2), 128))


def corrn_readout(x_fb, w_p, b_p, n_out):
    """x_fb: (F, B) f32 feature-major input; w_p: (n_pad, F) bf16; b_p: (n_pad, 1) f32."""
    F, B = x_fb.shape
    n_pad = w_p.shape[0]

    bn = _choose_batch_tile(B)
    b_pad = _round_up(B, bn)
    if b_pad != B:
        # Only triggers for large batches that don't divide the tile; tiny
        # batches use bn == B and skip this pass entirely.
        x_fb = jnp.pad(x_fb, ((0, 0), (0, b_pad - B)))

    out = pl.pallas_call(
        _readout_kernel,
        out_shape=jax.ShapeDtypeStruct((n_pad, b_pad), jnp.float32),
        grid=(b_pad // bn,),
        in_specs=[
            pl.BlockSpec((n_pad, F), lambda i: (0, 0)),   # weight: resident
            pl.BlockSpec((n_pad, 1), lambda i: (0, 0)),   # bias:   resident
            pl.BlockSpec((F, bn), lambda i: (0, i)),      # x: streamed over batch lanes
        ],
        out_specs=pl.BlockSpec((n_pad, bn), lambda i: (0, i)),
        compiler_params=pltpu.CompilerParams(
            dimension_semantics=("parallel",)),
    )(w_p, b_p, x_fb)

    # Tiny (n_pad, B) result: slice + transpose in JAX.
    return out[:n_out, :B].T


def corrn_forward(x, w_p, b_p, n_out, get_seq=False):
    """Mirrors coRNN.forward (linear readout on the flattened sequence).

    x: (T, B, C) with T*C == 784.  Returns (output (B, n_out), []).
    """
    y_seq = []
    T, B, C = x.shape
    # PyTorch: x.permute(1,0,2).reshape(B, T*C)[b, t*C + c] == x[t, b, c].
    # The equivalent feature-major layout the kernel wants is
    #   x_fb[t*C + c, b] == x[t, b, c]  ==  x.transpose(0, 2, 1).reshape(T*C, B).
    # For C == 1 this transpose only swaps a size-1 axis (no HBM pass); for
    # C > 1 it performs the genuinely required permute.
    x_fb = jnp.transpose(x, (0, 2, 1)).reshape(T * C, B)
    output = corrn_readout(x_fb, w_p, b_p, n_out)
    return output, y_seq


if __name__ == "__main__":
    # sMNIST convention: T*C = 784 (T=784, C=1).  Small demo batch.
    T, B, C = 784, 2, 1
    n_out = 10

    key = jax.random.PRNGKey(0)
    kx, kw, kb = jax.random.split(key, 3)

    x = jax.random.normal(kx, (T, B, C), dtype=jnp.float32)

    # Deterministic nn.Linear-style init: U(-1/sqrt(fan_in), 1/sqrt(fan_in))
    fan_in = T * C
    bound = 1.0 / jnp.sqrt(jnp.float32(fan_in))
    weight = jax.random.uniform(kw, (n_out, fan_in), jnp.float32, -bound, bound)
    bias = jax.random.uniform(kb, (n_out,), jnp.float32, -bound, bound)

    # One-time parameter prep (pad n_out -> 128, cast to bf16) — setup, not hot path.
    w_p, b_p, n_out_real = prepare_readout_params(weight, bias)

    fwd = jax.jit(lambda xx, ww, bb_: corrn_forward(xx, ww, bb_, n_out_real))
    out, y_seq = fwd(x, w_p, b_p)
    out = jax.block_until_ready(out)

    # Reference check in plain JAX (bf16-operand reference + looser f32 reference).
    x_flat_ref = jnp.transpose(x, (1, 0, 2)).reshape(B, -1)
    ref_f32 = x_flat_ref @ weight.T + bias
    ref_bf16 = (x_flat_ref.astype(jnp.bfloat16).astype(jnp.float32)
                @ weight.astype(jnp.bfloat16).astype(jnp.float32).T + bias)

    assert out.shape == (B, n_out)
    assert jnp.allclose(out, ref_bf16, atol=1e-3, rtol=1e-3), "mismatch vs bf16 reference"
    assert jnp.allclose(out, ref_f32, atol=2e-2, rtol=2e-2), "mismatch vs f32 reference"
    assert y_seq == []

    print("KERNEL_OK")
</pallas_src>

<mosaic_0001>
module attributes {stable_mosaic.version = 11 : i64} {
  func.func @_readout_kernel(%arg0: i32, %arg1: memref<128x784xbf16, #tpu.memory_space<vmem>>, %arg2: memref<128x1xf32, #tpu.memory_space<vmem>>, %arg3: memref<784x2xf32, #tpu.memory_space<vmem>>, %arg4: memref<128x2xf32, #tpu.memory_space<vmem>>) attributes {dimension_semantics = [#tpu.dimension_semantics<parallel>], iteration_bounds = array<i64: 1>, scalar_prefetch = 0 : i64, scratch_operands = 0 : i64, tpu.core_type = #tpu.core_type<tc>, window_params = [{pipeline_mode = #tpu.pipeline_mode<synchronous>, transform_indices = @transform_0, window_bounds = array<i64: 128, 784>}, {pipeline_mode = #tpu.pipeline_mode<synchronous>, transform_indices = @transform_1, window_bounds = array<i64: 128, 1>}, {transform_indices = @transform_2, window_bounds = array<i64: 784, 2>}, {transform_indices = @transform_3, window_bounds = array<i64: 128, 2>}]} {
    %c0 = arith.constant 0 : index
    %c0_0 = arith.constant 0 : index
    %0 = vector.load %arg3[%c0, %c0_0] : memref<784x2xf32, #tpu.memory_space<vmem>>, vector<784x2xf32>
    %1 = arith.truncf %0 : vector<784x2xf32> to vector<784x2xbf16>
    %c0_1 = arith.constant 0 : index
    %c0_2 = arith.constant 0 : index
    %2 = vector.load %arg1[%c0_1, %c0_2] : memref<128x784xbf16, #tpu.memory_space<vmem>>, vector<128x784xbf16>
    %cst = arith.constant dense<0.000000e+00> : vector<128x2xf32>
    %3 = tpu.matmul %2, %1, %cst {dimension_numbers = #tpu.dot_dimension_numbers<[1], [0], [0], [1], [0, 0, 1, 1], [], []>} : vector<128x784xbf16>, vector<784x2xbf16>, vector<128x2xf32> -> vector<128x2xf32>
    %c0_3 = arith.constant 0 : index
    %c0_4 = arith.constant 0 : index
    %4 = vector.load %arg2[%c0_3, %c0_4] : memref<128x1xf32, #tpu.memory_space<vmem>>, vector<128x1xf32>
    %5 = vector.broadcast %4 : vector<128x1xf32> to vector<128x2xf32>
    %6 = arith.addf %3, %5 : vector<128x2xf32>
    %c0_5 = arith.constant 0 : index
    %c0_6 = arith.constant 0 : index
    %7 = vector.load %arg4[%c0_5, %c0_6] : memref<128x2xf32, #tpu.memory_space<vmem>>, vector<128x2xf32>
    tpu.vector_store %arg4[%c0_5, %c0_6], %6 {strides = array<i32>} : memref<128x2xf32, #tpu.memory_space<vmem>>, vector<128x2xf32>,
    return
  }
  func.func @transform_0(%arg0: i32) -> (i32, i32) {
    %c0_i32 = arith.constant 0 : i32
    %c0_i32_0 = arith.constant 0 : i32
    %c0_i32_1 = arith.constant 0 : i32
    return %c0_i32, %c0_i32_0 : i32, i32
  }
  func.func @transform_1(%arg0: i32) -> (i32, i32) {
    %c0_i32 = arith.constant 0 : i32
    %c0_i32_0 = arith.constant 0 : i32
    %c0_i32_1 = arith.constant 0 : i32
    return %c0_i32, %c0_i32_0 : i32, i32
  }
  func.func @transform_2(%arg0: i32) -> (i32, i32) {
    %c0_i32 = arith.constant 0 : i32
    %c0_i32_0 = arith.constant 0 : i32
    return %c0_i32, %arg0 : i32, i32
  }
  func.func @transform_3(%arg0: i32) -> (i32, i32) {
    %c0_i32 = arith.constant 0 : i32
    %c0_i32_0 = arith.constant 0 : i32
    return %c0_i32, %arg0 : i32, i32
  }
}

</mosaic_0001>

<llo_original>
// kernel: _lambda_.1
$region0: #{_lambda_.1}
  #allocation0 [shape = 'u32[]', space=smem, size = 0x4, offset = 0x4, fixed_abs, tag = 'smem constant byte address 0x4 - core index']
  #allocation1 [shape = 'u32[144,128]{1,0:T(1,128)}', space=vmem, size = 0x12000, scoped, tag = 'internal scratch']
  %s0 = inlined_call_operand.vmem [shape: bf16[128,784], index: 0, kind: input, shape index: {}]
  %s1 = inlined_call_operand.vmem [shape: f32[128,1], index: 1, kind: input, shape index: {}]
  %s2 = inlined_call_operand.vmem [shape: f32[784,2], index: 2, kind: input, shape index: {}]
  %s3 = inlined_call_operand.vmem [shape: f32[128,2], index: 3, kind: output, shape index: {}]
  %s4 = sld [smem:[#allocation0]]
  $region22: #{_lambda_.1} parent=0
    _
  %s6 = ssub.s32 1, %s4
  %s7 = scalar_select 0, %s6, %s4
  // Predicated region
  $region2: #{_lambda_.1} parent=0 // pred_check
    _
  $region3: #{_lambda_.1} parent=0 // pred_check_branch
    %9 = sbr.rel (0) target = $region5
  $region4: #{_lambda_.1} parent=0 // pred_region
    _
  $region5: #{_lambda_.1} parent=0 // pred_fallthru
    _
  // Predicated region
  $region6: #{_lambda_.1} parent=0 // pred_check
    _
  $region7: #{_lambda_.1} parent=0 // pred_check_branch
    %11 = sbr.rel (0) target = $region9
  $region8: #{_lambda_.1} parent=0 // pred_region
    _
  $region9: #{_lambda_.1} parent=0 // pred_fallthru
    _
  // Predicated region
  $region10: #{_lambda_.1} parent=0 // pred_check
    _
  $region11: #{_lambda_.1} parent=0 // pred_check_branch
    %13 = sbr.rel (0) target = $region13
  $region12: #{_lambda_.1} parent=0 // pred_region
    _
  $region13: #{_lambda_.1} parent=0 // pred_fallthru
    _
  %v15 = vld [vmem:[%s2] sm:$0xff]
  %v16 = vld [vmem:[%s2 + $0x8] sm:$0xff]
  %v17 = vld [vmem:[%s2 + $0x10] sm:$0xff]
  %v18 = vld [vmem:[%s2 + $0x18] sm:$0xff]
  %v19 = vld [vmem:[%s2 + $0x20] sm:$0xff]
  %v20 = vld [vmem:[%s2 + $0x28] sm:$0xff]
  %v21 = vld [vmem:[%s2 + $0x30] sm:$0xff]
  %v22 = vld [vmem:[%s2 + $0x38] sm:$0xff]
  %v23 = vld [vmem:[%s2 + $0x40] sm:$0xff]
  %v24 = vld [vmem:[%s2 + $0x48] sm:$0xff]
  %v25 = vld [vmem:[%s2 + $0x50] sm:$0xff]
  %v26 = vld [vmem:[%s2 + $0x58] sm:$0xff]
  %v27 = vld [vmem:[%s2 + $0x60] sm:$0xff]
  %v28 = vld [vmem:[%s2 + $0x68] sm:$0xff]
  %v29 = vld [vmem:[%s2 + $0x70] sm:$0xff]
  %v30 = vld [vmem:[%s2 + $0x78] sm:$0xff]
  %v31 = vld [vmem:[%s2 + $0x80] sm:$0xff]
  %v32 = vld [vmem:[%s2 + $0x88] sm:$0xff]
  %v33 = vld [vmem:[%s2 + $0x90] sm:$0xff]
  %v34 = vld [vmem:[%s2 + $0x98] sm:$0xff]
  %v35 = vld [vmem:[%s2 + $0xa0] sm:$0xff]
  %v36 = vld [vmem:[%s2 + $0xa8] sm:$0xff]
  %v37 = vld [vmem:[%s2 + $0xb0] sm:$0xff]
  %v38 = vld [vmem:[%s2 + $0xb8] sm:$0xff]
  %v39 = vld [vmem:[%s2 + $0xc0] sm:$0xff]
  %v40 = vld [vmem:[%s2 + $0xc8] sm:$0xff]
  %v41 = vld [vmem:[%s2 + $0xd0] sm:$0xff]
  %v42 = vld [vmem:[%s2 + $0xd8] sm:$0xff]
  %v43 = vld [vmem:[%s2 + $0xe0] sm:$0xff]
  %v44 = vld [vmem:[%s2 + $0xe8] sm:$0xff]
  %v45 = vld [vmem:[%s2 + $0xf0] sm:$0xff]
  %v46 = vld [vmem:[%s2 + $0xf8] sm:$0xff]
  %v47 = vld [vmem:[%s2 + $0x100] sm:$0xff]
  %v48 = vld [vmem:[%s2 + $0x108] sm:$0xff]
  %v49 = vld [vmem:[%s2 + $0x110] sm:$0xff]
  %v50 = vld [vmem:[%s2 + $0x118] sm:$0xff]
  %v51 = vld [vmem:[%s2 + $0x120] sm:$0xff]
  %v52 = vld [vmem:[%s2 + $0x128] sm:$0xff]
  %v53 = vld [vmem:[%s2 + $0x130] sm:$0xff]
  %v54 = vld [vmem:[%s2 + $0x138] sm:$0xff]
  %v55 = vld [vmem:[%s2 + $0x140] sm:$0xff]
  %v56 = vld [vmem:[%s2 + $0x148] sm:$0xff]
  %v57 = vld [vmem:[%s2 + $0x150] sm:$0xff]
  %v58 = vld [vmem:[%s2 + $0x158] sm:$0xff]
  %v59 = vld [vmem:[%s2 + $0x160] sm:$0xff]
  %v60 = vld [vmem:[%s2 + $0x168] sm:$0xff]
  %v61 = vld [vmem:[%s2 + $0x170] sm:$0xff]
  %v62 = vld [vmem:[%s2 + $0x178] sm:$0xff]
  %v63 = vld [vmem:[%s2 + $0x180] sm:$0xff]
  %v64 = vld [vmem:[%s2 + $0x188] sm:$0xff]
  %v65 = vld [vmem:[%s2 + $0x190] sm:$0xff]
  %v66 = vld [vmem:[%s2 + $0x198] sm:$0xff]
  %v67 = vld [vmem:[%s2 + $0x1a0] sm:$0xff]
  %v68 = vld [vmem:[%s2 + $0x1a8] sm:$0xff]
  %v69 = vld [vmem:[%s2 + $0x1b0] sm:$0xff]
  %v70 = vld [vmem:[%s2 + $0x1b8] sm:$0xff]
  %v71 = vld [vmem:[%s2 + $0x1c0] sm:$0xff]
  %v72 = vld [vmem:[%s2 + $0x1c8] sm:$0xff]
  %v73 = vld [vmem:[%s2 + $0x1d0] sm:$0xff]
  %v74 = vld [vmem:[%s2 + $0x1d8] sm:$0xff]
  %v75 = vld [vmem:[%s2 + $0x1e0] sm:$0xff]
  %v76 = vld [vmem:[%s2 + $0x1e8] sm:$0xff]
  %v77 = vld [vmem:[%s2 + $0x1f0] sm:$0xff]
  %v78 = vld [vmem:[%s2 + $0x1f8] sm:$0xff]
  %v79 = vld [vmem:[%s2 + $0x200] sm:$0xff]
  %v80 = vld [vmem:[%s2 + $0x208] sm:$0xff]
  %v81 = vld [vmem:[%s2 + $0x210] sm:$0xff]
  %v82 = vld [vmem:[%s2 + $0x218] sm:$0xff]
  %v83 = vld [vmem:[%s2 + $0x220] sm:$0xff]
  %v84 = vld [vmem:[%s2 + $0x228] sm:$0xff]
  %v85 = vld [vmem:[%s2 + $0x230] sm:$0xff]
  %v86 = vld [vmem:[%s2 + $0x238] sm:$0xff]
  %v87 = vld [vmem:[%s2 + $0x240] sm:$0xff]
  %v88 = vld [vmem:[%s2 + $0x248] sm:$0xff]
  %v89 = vld [vmem:[%s2 + $0x250] sm:$0xff]
  %v90 = vld [vmem:[%s2 + $0x258] sm:$0xff]
  %v91 = vld [vmem:[%s2 + $0x260] sm:$0xff]
  %v92 = vld [vmem:[%s2 + $0x268] sm:$0xff]
  %v93 = vld [vmem:[%s2 + $0x270] sm:$0xff]
  %v94 = vld [vmem:[%s2 + $0x278] sm:$0xff]
  %v95 = vld [vmem:[%s2 + $0x280] sm:$0xff]
  %v96 = vld [vmem:[%s2 + $0x288] sm:$0xff]
  %v97 = vld [vmem:[%s2 + $0x290] sm:$0xff]
  %v98 = vld [vmem:[%s2 + $0x298] sm:$0xff]
  %v99 = vld [vmem:[%s2 + $0x2a0] sm:$0xff]
  %v100 = vld [vmem:[%s2 + $0x2a8] sm:$0xff]
  %v101 = vld [vmem:[%s2 + $0x2b0] sm:$0xff]
  %v102 = vld [vmem:[%s2 + $0x2b8] sm:$0xff]
  %v103 = vld [vmem:[%s2 + $0x2c0] sm:$0xff]
  %v104 = vld [vmem:[%s2 + $0x2c8] sm:$0xff]
  %v105 = vld [vmem:[%s2 + $0x2d0] sm:$0xff]
  %v106 = vld [vmem:[%s2 + $0x2d8] sm:$0xff]
  %v107 = vld [vmem:[%s2 + $0x2e0] sm:$0xff]
  %v108 = vld [vmem:[%s2 + $0x2e8] sm:$0xff]
  %v109 = vld [vmem:[%s2 + $0x2f0] sm:$0xff]
  %v110 = vld [vmem:[%s2 + $0x2f8] sm:$0xff]
  %v111 = vld [vmem:[%s2 + $0x300] sm:$0xff]
  %v112 = vld [vmem:[%s2 + $0x308] sm:$0xff]
  %v113 = vpack.c.bf16 %v16, %v15
  %v114 = vpack.c.bf16 %v18, %v17
  %v115 = vpack.c.bf16 %v20, %v19
  %v116 = vpack.c.bf16 %v22, %v21
  %v117 = vpack.c.bf16 %v24, %v23
  %v118 = vpack.c.bf16 %v26, %v25
  %v119 = vpack.c.bf16 %v28, %v27
  %v120 = vpack.c.bf16 %v30, %v29
  %v121 = vpack.c.bf16 %v32, %v31
  %v122 = vpack.c.bf16 %v34, %v33
  %v123 = vpack.c.bf16 %v36, %v35
  %v124 = vpack.c.bf16 %v38, %v37
  %v125 = vpack.c.bf16 %v40, %v39
  %v126 = vpack.c.bf16 %v42, %v41
  %v127 = vpack.c.bf16 %v44, %v43
  %v128 = vpack.c.bf16 %v46, %v45
  %v129 = vpack.c.bf16 %v48, %v47
  %v130 = vpack.c.bf16 %v50, %v49
  %v131 = vpack.c.bf16 %v52, %v51
  %v132 = vpack.c.bf16 %v54, %v53
  %v133 = vpack.c.bf16 %v56, %v55
  %v134 = vpack.c.bf16 %v58, %v57
  %v135 = vpack.c.bf16 %v60, %v59
  %v136 = vpack.c.bf16 %v62, %v61
  %v137 = vpack.c.bf16 %v64, %v63
  %v138 = vpack.c.bf16 %v66, %v65
  %v139 = vpack.c.bf16 %v68, %v67
  %v140 = vpack.c.bf16 %v70, %v69
  %v141 = vpack.c.bf16 %v72, %v71
  %v142 = vpack.c.bf16 %v74, %v73
  %v143 = vpack.c.bf16 %v76, %v75
  %v144 = vpack.c.bf16 %v78, %v77
  %v145 = vpack.c.bf16 %v80, %v79
  %v146 = vpack.c.bf16 %v82, %v81
  %v147 = vpack.c.bf16 %v84, %v83
  %v148 = vpack.c.bf16 %v86, %v85
  %v149 = vpack.c.bf16 %v88, %v87
  %v150 = vpack.c.bf16 %v90, %v89
  %v151 = vpack.c.bf16 %v92, %v91
  %v152 = vpack.c.bf16 %v94, %v93
  %v153 = vpack.c.bf16 %v96, %v95
  %v154 = vpack.c.bf16 %v98, %v97
  %v155 = vpack.c.bf16 %v100, %v99
  %v156 = vpack.c.bf16 %v102, %v101
  %v157 = vpack.c.bf16 %v104, %v103
  %v158 = vpack.c.bf16 %v106, %v105
  %v159 = vpack.c.bf16 %v108, %v107
  %v160 = vpack.c.bf16 %v110, %v109
  %v161 = vpack.c.bf16 %v112, %v111
  %v162 = vld [vmem:[%s0] sm:$0xff]
  %v163 = vld [vmem:[%s0 + $0x8] sm:$0xff]
  %v164 = vld [vmem:[%s0 + $0x10] sm:$0xff]
  %v165 = vld [vmem:[%s0 + $0x18] sm:$0xf]
  %v166 = vld [vmem:[%s0 + $0x1c] sm:$0xff]
  %v167 = vld [vmem:[%s0 + $0x24] sm:$0xff]
  %v168 = vld [vmem:[%s0 + $0x2c] sm:$0xff]
  %v169 = vld [vmem:[%s0 + $0x34] sm:$0xf]
  %v170 = vld [vmem:[%s0 + $0x38] sm:$0xff]
  %v171 = vld [vmem:[%s0 + $0x40] sm:$0xff]
  %v172 = vld [vmem:[%s0 + $0x48] sm:$0xff]
  %v173 = vld [vmem:[%s0 + $0x50] sm:$0xf]
  %v174 = vld [vmem:[%s0 + $0x54] sm:$0xff]
  %v175 = vld [vmem:[%s0 + $0x5c] sm:$0xff]
  %v176 = vld [vmem:[%s0 + $0x64] sm:$0xff]
  %v177 = vld [vmem:[%s0 + $0x6c] sm:$0xf]
  %v178 = vld [vmem:[%s0 + $0x70] sm:$0xff]
  %v179 = vld [vmem:[%s0 + $0x78] sm:$0xff]
  %v180 = vld [vmem:[%s0 + $0x80] sm:$0xff]
  %v181 = vld [vmem:[%s0 + $0x88] sm:$0xf]
  %v182 = vld [vmem:[%s0 + $0x8c] sm:$0xff]
  %v183 = vld [vmem:[%s0 + $0x94] sm:$0xff]
  %v184 = vld [vmem:[%s0 + $0x9c] sm:$0xff]
  %v185 = vld [vmem:[%s0 + $0xa4] sm:$0xf]
  %v186 = vld [vmem:[%s0 + $0xa8] sm:$0xff]
  %v187 = vld [vmem:[%s0 + $0xb0] sm:$0xff]
  %v188 = vld [vmem:[%s0 + $0xb8] sm:$0xff]
  %v189 = vld [vmem:[%s0 + $0xc0] sm:$0xf]
  %v190 = vld [vmem:[%s0 + $0xc4] sm:$0xff]
  %v191 = vld [vmem:[%s0 + $0xcc] sm:$0xff]
  %v192 = vld [vmem:[%s0 + $0xd4] sm:$0xff]
  %v193 = vld [vmem:[%s0 + $0xdc] sm:$0xf]
  %v194 = vld [vmem:[%s0 + $0xe0] sm:$0xff]
  %v195 = vld [vmem:[%s0 + $0xe8] sm:$0xff]
  %v196 = vld [vmem:[%s0 + $0xf0] sm:$0xff]
  %v197 = vld [vmem:[%s0 + $0xf8] sm:$0xf]
  %v198 = vld [vmem:[%s0 + $0xfc] sm:$0xff]
  %v199 = vld [vmem:[%s0 + $0x104] sm:$0xff]
  %v200 = vld [vmem:[%s0 + $0x10c] sm:$0xff]
  %v201 = vld [vmem:[%s0 + $0x114] sm:$0xf]
  %v202 = vld [vmem:[%s0 + $0x118] sm:$0xff]
  %v203 = vld [vmem:[%s0 + $0x120] sm:$0xff]
  %v204 = vld [vmem:[%s0 + $0x128] sm:$0xff]
  %v205 = vld [vmem:[%s0 + $0x130] sm:$0xf]
  %v206 = vld [vmem:[%s0 + $0x134] sm:$0xff]
  %v207 = vld [vmem:[%s0 + $0x13c] sm:$0xff]
  %v208 = vld [vmem:[%s0 + $0x144] sm:$0xff]
  %v209 = vld [vmem:[%s0 + $0x14c] sm:$0xf]
  %v210 = vld [vmem:[%s0 + $0x150] sm:$0xff]
  %v211 = vld [vmem:[%s0 + $0x158] sm:$0xff]
  %v212 = vld [vmem:[%s0 + $0x160] sm:$0xff]
  %v213 = vld [vmem:[%s0 + $0x168] sm:$0xf]
  %v214 = vld [vmem:[%s0 + $0x16c] sm:$0xff]
  %v215 = vld [vmem:[%s0 + $0x174] sm:$0xff]
  %v216 = vld [vmem:[%s0 + $0x17c] sm:$0xff]
  %v217 = vld [vmem:[%s0 + $0x184] sm:$0xf]
  %v218 = vld [vmem:[%s0 + $0x188] sm:$0xff]
  %v219 = vld [vmem:[%s0 + $0x190] sm:$0xff]
  %v220 = vld [vmem:[%s0 + $0x198] sm:$0xff]
  %v221 = vld [vmem:[%s0 + $0x1a0] sm:$0xf]
  %v222 = vld [vmem:[%s0 + $0x1a4] sm:$0xff]
  %v223 = vld [vmem:[%s0 + $0x1ac] sm:$0xff]
  %v224 = vld [vmem:[%s0 + $0x1b4] sm:$0xff]
  %v225 = vld [vmem:[%s0 + $0x1bc] sm:$0xf]
  %v226 = vld [vmem:[%s1] sm:$0xff]
  %v227 = vld [vmem:[%s1 + $0x8] sm:$0xff]
  %v228 = vld [vmem:[%s1 + $0x10] sm:$0xff]
  %v229 = vld [vmem:[%s1 + $0x18] sm:$0xff]
  %v230 = vld [vmem:[%s1 + $0x20] sm:$0xff]
  %v231 = vld [vmem:[%s1 + $0x28] sm:$0xff]
  %v232 = vld [vmem:[%s1 + $0x30] sm:$0xff]
  %v233 = vld [vmem:[%s1 + $0x38] sm:$0xff]
  %v234 = vld [vmem:[%s1 + $0x40] sm:$0xff]
  %v235 = vld [vmem:[%s1 + $0x48] sm:$0xff]
  %v236 = vld [vmem:[%s1 + $0x50] sm:$0xff]
  %v237 = vld [vmem:[%s1 + $0x58] sm:$0xff]
  %v238 = vld [vmem:[%s1 + $0x60] sm:$0xff]
  %v239 = vld [vmem:[%s1 + $0x68] sm:$0xff]
  %v240 = vld [vmem:[%s1 + $0x70] sm:$0xff]
  %v241 = vld [vmem:[%s1 + $0x78] sm:$0xff]
  %243 = vset.pattern.permute.xlu0 0
  %244 = vperm.xlu0 %243, %v226
  %v245 = vpop.permute.xlu0 %244
  %248 = vset.pattern.permute.xlu0 0
  %249 = vperm.xlu0 %248, %v227
  %v250 = vpop.permute.xlu0 %249
  %253 = vset.pattern.permute.xlu0 0
  %254 = vperm.xlu0 %253, %v228
  %v255 = vpop.permute.xlu0 %254
  %258 = vset.pattern.permute.xlu0 0
  %259 = vperm.xlu0 %258, %v229
  %v260 = vpop.permute.xlu0 %259
  %263 = vset.pattern.permute.xlu0 0
  %264 = vperm.xlu0 %263, %v230
  %v265 = vpop.permute.xlu0 %264
  %268 = vset.pattern.permute.xlu0 0
  %269 = vperm.xlu0 %268, %v231
  %v270 = vpop.permute.xlu0 %269
  %273 = vset.pattern.permute.xlu0 0
  %274 = vperm.xlu0 %273, %v232
  %v275 = vpop.permute.xlu0 %274
  %278 = vset.pattern.permute.xlu0 0
  %279 = vperm.xlu0 %278, %v233
  %v280 = vpop.permute.xlu0 %279
  %283 = vset.pattern.permute.xlu0 0
  %284 = vperm.xlu0 %283, %v234
  %v285 = vpop.permute.xlu0 %284
  %288 = vset.pattern.permute.xlu0 0
  %289 = vperm.xlu0 %288, %v235
  %v290 = vpop.permute.xlu0 %289
  %293 = vset.pattern.permute.xlu0 0
  %294 = vperm.xlu0 %293, %v236
  %v295 = vpop.permute.xlu0 %294
  %298 = vset.pattern.permute.xlu0 0
  %299 = vperm.xlu0 %298, %v237
  %v300 = vpop.permute.xlu0 %299
  %303 = vset.pattern.permute.xlu0 0
  %304 = vperm.xlu0 %303, %v238
  %v305 = vpop.permute.xlu0 %304
  %308 = vset.pattern.permute.xlu0 0
  %309 = vperm.xlu0 %308, %v239
  %v310 = vpop.permute.xlu0 %309
  %313 = vset.pattern.permute.xlu0 0
  %314 = vperm.xlu0 %313, %v240
  %v315 = vpop.permute.xlu0 %314
  %318 = vset.pattern.permute.xlu0 0
  %319 = vperm.xlu0 %318, %v241
  %v320 = vpop.permute.xlu0 %319
  %v386 = vunpack.c.l.b16 %v162
  %v387 = vunpack.c.h.b16 %v162
  %v388 = vunpack.c.l.b16 %v163
  %v389 = vunpack.c.h.b16 %v163
  %v390 = vunpack.c.l.b16 %v164
  %v391 = vunpack.c.h.b16 %v164
  %v392 = vunpack.c.l.b16 %v165
  %v393 = vunpack.c.l.b16 %v166
  %v394 = vunpack.c.h.b16 %v166
  %v395 = vunpack.c.l.b16 %v167
  %v396 = vunpack.c.h.b16 %v167
  %v397 = vunpack.c.l.b16 %v168
  %v398 = vunpack.c.h.b16 %v168
  %v399 = vunpack.c.l.b16 %v169
  %v400 = vunpack.c.l.b16 %v170
  %v401 = vunpack.c.h.b16 %v170
  %v402 = vunpack.c.l.b16 %v171
  %v403 = vunpack.c.h.b16 %v171
  %v404 = vunpack.c.l.b16 %v172
  %v405 = vunpack.c.h.b16 %v172
  %v406 = vunpack.c.l.b16 %v173
  %v407 = vunpack.c.l.b16 %v174
  %v408 = vunpack.c.h.b16 %v174
  %v409 = vunpack.c.l.b16 %v175
  %v410 = vunpack.c.h.b16 %v175
  %v411 = vunpack.c.l.b16 %v176
  %v412 = vunpack.c.h.b16 %v176
  %v413 = vunpack.c.l.b16 %v177
  %v414 = vunpack.c.l.b16 %v178
  %v415 = vunpack.c.h.b16 %v178
  %v416 = vunpack.c.l.b16 %v179
  %v417 = vunpack.c.h.b16 %v179
  %v418 = vunpack.c.l.b16 %v180
  %v419 = vunpack.c.h.b16 %v180
  %v420 = vunpack.c.l.b16 %v181
  %v421 = vunpack.c.l.b16 %v182
  %v422 = vunpack.c.h.b16 %v182
  %v423 = vunpack.c.l.b16 %v183
  %v424 = vunpack.c.h.b16 %v183
  %v425 = vunpack.c.l.b16 %v184
  %v426 = vunpack.c.h.b16 %v184
  %v427 = vunpack.c.l.b16 %v185
  %v428 = vunpack.c.l.b16 %v186
  %v429 = vunpack.c.h.b16 %v186
  %v430 = vunpack.c.l.b16 %v187
  %v431 = vunpack.c.h.b16 %v187
  %v432 = vunpack.c.l.b16 %v188
  %v433 = vunpack.c.h.b16 %v188
  %v434 = vunpack.c.l.b16 %v189
  %v435 = vunpack.c.l.b16 %v190
  %v436 = vunpack.c.h.b16 %v190
  %v437 = vunpack.c.l.b16 %v191
  %v438 = vunpack.c.h.b16 %v191
  %v439 = vunpack.c.l.b16 %v192
  %v440 = vunpack.c.h.b16 %v192
  %v441 = vunpack.c.l.b16 %v193
  %v442 = vunpack.c.l.b16 %v194
  %v443 = vunpack.c.h.b16 %v194
  %v444 = vunpack.c.l.b16 %v195
  %v445 = vunpack.c.h.b16 %v195
  %v446 = vunpack.c.l.b16 %v196
  %v447 = vunpack.c.h.b16 %v196
  %v448 = vunpack.c.l.b16 %v197
  %v449 = vunpack.c.l.b16 %v198
  %v450 = vunpack.c.h.b16 %v198
  %v451 = vunpack.c.l.b16 %v199
  %v452 = vunpack.c.h.b16 %v199
  %v453 = vunpack.c.l.b16 %v200
  %v454 = vunpack.c.h.b16 %v200
  %v455 = vunpack.c.l.b16 %v201
  %v456 = vunpack.c.l.b16 %v202
  %v457 = vunpack.c.h.b16 %v202
  %v458 = vunpack.c.l.b16 %v203
  %v459 = vunpack.c.h.b16 %v203
  %v460 = vunpack.c.l.b16 %v204
  %v461 = vunpack.c.h.b16 %v204
  %v462 = vunpack.c.l.b16 %v205
  %v463 = vunpack.c.l.b16 %v206
  %v464 = vunpack.c.h.b16 %v206
  %v465 = vunpack.c.l.b16 %v207
  %v466 = vunpack.c.h.b16 %v207
  %v467 = vunpack.c.l.b16 %v208
  %v468 = vunpack.c.h.b16 %v208
  %v469 = vunpack.c.l.b16 %v209
  %v470 = vunpack.c.l.b16 %v210
  %v471 = vunpack.c.h.b16 %v210
  %v472 = vunpack.c.l.b16 %v211
  %v473 = vunpack.c.h.b16 %v211
  %v474 = vunpack.c.l.b16 %v212
  %v475 = vunpack.c.h.b16 %v212
  %v476 = vunpack.c.l.b16 %v213
  %v477 = vunpack.c.l.b16 %v214
  %v478 = vunpack.c.h.b16 %v214
  %v479 = vunpack.c.l.b16 %v215
  %v480 = vunpack.c.h.b16 %v215
  %v481 = vunpack.c.l.b16 %v216
  %v482 = vunpack.c.h.b16 %v216
  %v483 = vunpack.c.l.b16 %v217
  %v484 = vunpack.c.l.b16 %v218
  %v485 = vunpack.c.h.b16 %v218
  %v486 = vunpack.c.l.b16 %v219
  %v487 = vunpack.c.h.b16 %v219
  %v488 = vunpack.c.l.b16 %v220
  %v489 = vunpack.c.h.b16 %v220
  %v490 = vunpack.c.l.b16 %v221
  %v491 = vunpack.c.l.b16 %v222
  %v492 = vunpack.c.h.b16 %v222
  %v493 = vunpack.c.l.b16 %v223
  %v494 = vunpack.c.h.b16 %v223
  %v495 = vunpack.c.l.b16 %v224
  %v496 = vunpack.c.h.b16 %v224
  %v497 = vunpack.c.l.b16 %v225
  %v498 = vpack.c.b16 %v393, %v386
  %v499 = vpack.c.b16 %v394, %v387
  %v500 = vpack.c.b16 %v395, %v388
  %v501 = vpack.c.b16 %v396, %v389
  %v502 = vpack.c.b16 %v397, %v390
  %v503 = vpack.c.b16 %v398, %v391
  %v504 = vpack.c.b16 %v399, %v392
  %v505 = vpack.c.b16 %v407, %v400
  %v506 = vpack.c.b16 %v408, %v401
  %v507 = vpack.c.b16 %v409, %v402
  %v508 = vpack.c.b16 %v410, %v403
  %v509 = vpack.c.b16 %v411, %v404
  %v510 = vpack.c.b16 %v412, %v405
  %v511 = vpack.c.b16 %v413, %v406
  %v512 = vpack.c.b16 %v421, %v414
  %v513 = vpack.c.b16 %v422, %v415
  %v514 = vpack.c.b16 %v423, %v416
  %v515 = vpack.c.b16 %v424, %v417
  %v516 = vpack.c.b16 %v425, %v418
  %v517 = vpack.c.b16 %v426, %v419
  %v518 = vpack.c.b16 %v427, %v420
  %v519 = vpack.c.b16 %v435, %v428
  %v520 = vpack.c.b16 %v436, %v429
  %v521 = vpack.c.b16 %v437, %v430
  %v522 = vpack.c.b16 %v438, %v431
  %v523 = vpack.c.b16 %v439, %v432
  %v524 = vpack.c.b16 %v440, %v433
  %v525 = vpack.c.b16 %v441, %v434
  %v526 = vpack.c.b16 %v449, %v442
  %v527 = vpack.c.b16 %v450, %v443
  %v528 = vpack.c.b16 %v451, %v444
  %v529 = vpack.c.b16 %v452, %v445
  %v530 = vpack.c.b16 %v453, %v446
  %v531 = vpack.c.b16 %v454, %v447
  %v532 = vpack.c.b16 %v455, %v448
  %v533 = vpack.c.b16 %v463, %v456
  %v534 = vpack.c.b16 %v464, %v457
  %v535 = vpack.c.b16 %v465, %v458
  %v536 = vpack.c.b16 %v466, %v459
  %v537 = vpack.c.b16 %v467, %v460
  %v538 = vpack.c.b16 %v468, %v461
  %v539 = vpack.c.b16 %v469, %v462
  %v540 = vpack.c.b16 %v477, %v470
  %v541 = vpack.c.b16 %v478, %v471
  %v542 = vpack.c.b16 %v479, %v472
  %v543 = vpack.c.b16 %v480, %v473
  %v544 = vpack.c.b16 %v481, %v474
  %v545 = vpack.c.b16 %v482, %v475
  %v546 = vpack.c.b16 %v483, %v476
  %v547 = vpack.c.b16 %v491, %v484
  %v548 = vpack.c.b16 %v492, %v485
  %v549 = vpack.c.b16 %v493, %v486
  %v550 = vpack.c.b16 %v494, %v487
  %v551 = vpack.c.b16 %v495, %v488
  %v552 = vpack.c.b16 %v496, %v489
  %v553 = vpack.c.b16 %v497, %v490
  %vm602 = vcmask 130048
  %v604 = vsel %vm602, %v504, 0
  %v607 = vsel %vm602, %v511, 0
  %v610 = vsel %vm602, %v518, 0
  %v613 = vsel %vm602, %v525, 0
  %v616 = vsel %vm602, %v532, 0
  %v619 = vsel %vm602, %v539, 0
  %v622 = vsel %vm602, %v546, 0
  %v625 = vsel %vm602, %v553, 0
  %627 = vmatprep.subr.bf16.mxu0 0
  %628 = vmatpush1.bf16.msra.mxu0 %v113
  %629 = vmatprep.subr.bf16.mxu0 0
  %630 = vmatpush1.bf16.msra.mxu0 %v114
  %631 = vmatprep.subr.bf16.mxu0 0
  %632 = vmatpush1.bf16.msra.mxu0 %v115
  %633 = vmatprep.subr.bf16.mxu0 0
  %634 = vmatpush1.bf16.msra.mxu0 %v116
  %635 = vmatprep.subr.bf16.mxu0 0
  %636 = vmatpush1.bf16.msra.mxu0 %v117
  %637 = vmatprep.subr.bf16.mxu0 0
  %638 = vmatpush1.bf16.msra.mxu0 %v118
  %639 = vmatprep.subr.bf16.mxu0 0
  %640 = vmatpush1.bf16.msra.mxu0 %v119
  %641 = vmatprep.subr.bf16.mxu0 0
  %642 = vmatpush1.bf16.msra.mxu0 %v120
  %643 = vmatprep.subr.bf16.mxu0 0
  %644 = vmatpush1.bf16.msra.mxu0 %v121
  %645 = vmatprep.subr.bf16.mxu0 0
  %646 = vmatpush1.bf16.msra.mxu0 %v122
  %647 = vmatprep.subr.bf16.mxu0 0
  %648 = vmatpush1.bf16.msra.mxu0 %v123
  %649 = vmatprep.subr.bf16.mxu0 0
  %650 = vmatpush1.bf16.msra.mxu0 %v124
  %651 = vmatprep.subr.bf16.mxu0 0
  %652 = vmatpush1.bf16.msra.mxu0 %v125
  %653 = vmatprep.subr.bf16.mxu0 0
  %654 = vmatpush1.bf16.msra.mxu0 %v126
  %655 = vmatprep.subr.bf16.mxu0 0
  %656 = vmatpush1.bf16.msra.mxu0 %v127
  %657 = vmatprep.subr.bf16.mxu0 0
  %658 = vmatpush1.bf16.msra.mxu0 %v128
  %659 = vmatprep.mubr.bf16.mxu0 %v499
  %660 = vmatmul.mubr.bf16.gmra.mrb[0].mxu0 %v498
  %v661 = vpop.f32.mrb[0].mxu0
  %v662 = vadd.f32 %v245, %v661
  %v663 = vpop.f32.mrb[0].mxu0
  %v664 = vpop.f32.mrb[0].mxu0
  %v665 = vadd.f32 %v250, %v664
  %v666 = vpop.f32.mrb[0].mxu0
  %667 = vmatprep.mubr.bf16.mxu0 %v506
  %668 = vmatmul.mubr.bf16.gmra.mrb[0].mxu0 %v505
  %v669 = vpop.f32.mrb[0].mxu0
  %v670 = vadd.f32 %v255, %v669
  %v671 = vpop.f32.mrb[0].mxu0
  %v672 = vpop.f32.mrb[0].mxu0
  %v673 = vadd.f32 %v260, %v672
  %v674 = vpop.f32.mrb[0].mxu0
  %675 = vmatprep.mubr.bf16.mxu0 %v513
  %676 = vmatmul.mubr.bf16.gmra.mrb[0].mxu0 %v512
  %v677 = vpop.f32.mrb[0].mxu0
  %v678 = vadd.f32 %v265, %v677
  %v679 = vpop.f32.mrb[0].mxu0
  %v680 = vpop.f32.mrb[0].mxu0
  %v681 = vadd.f32 %v270, %v680
  %v682 = vpop.f32.mrb[0].mxu0
  %683 = vmatprep.mubr.bf16.mxu0 %v520
  %684 = vmatmul.mubr.bf16.gmra.mrb[0].mxu0 %v519
  %v685 = vpop.f32.mrb[0].mxu0
  %v686 = vadd.f32 %v275, %v685
  %v687 = vpop.f32.mrb[0].mxu0
  %v688 = vpop.f32.mrb[0].mxu0
  %v689 = vadd.f32 %v280, %v688
  %v690 = vpop.f32.mrb[0].mxu0
  %691 = vmatprep.mubr.bf16.mxu0 %v527
  %692 = vmatmul.mubr.bf16.gmra.mrb[0].mxu0 %v526
  %v693 = vpop.f32.mrb[0].mxu0
  %v694 = vadd.f32 %v285, %v693
  %v695 = vpop.f32.mrb[0].mxu0
  %v696 = vpop.f32.mrb[0].mxu0
  %v697 = vadd.f32 %v290, %v696
  %v698 = vpop.f32.mrb[0].mxu0
  %699 = vmatprep.mubr.bf16.mxu0 %v534
  %700 = vmatmul.mubr.bf16.gmra.mrb[0].mxu0 %v533
  %v701 = vpop.f32.mrb[0].mxu0
  %v702 = vadd.f32 %v295, %v701
  %v703 = vpop.f32.mrb[0].mxu0
  %v704 = vpop.f32.mrb[0].mxu0
  %v705 = vadd.f32 %v300, %v704
  %v706 = vpop.f32.mrb[0].mxu0
  %707 = vmatprep.mubr.bf16.mxu0 %v541
  %708 = vmatmul.mubr.bf16.gmra.mrb[0].mxu0 %v540
  %v709 = vpop.f32.mrb[0].mxu0
  %v710 = vadd.f32 %v305, %v709
  %v711 = vpop.f32.mrb[0].mxu0
  %v712 = vpop.f32.mrb[0].mxu0
  %v713 = vadd.f32 %v310, %v712
  %v714 = vpop.f32.mrb[0].mxu0
  %715 = vmatprep.mubr.bf16.mxu0 %v548
  %716 = vmatmul.mubr.bf16.gmra.mrb[0].mxu0 %v547
  %v717 = vpop.f32.mrb[0].mxu0
  %v718 = vadd.f32 %v315, %v717
  %v719 = vpop.f32.mrb[0].mxu0
  %v720 = vpop.f32.mrb[0].mxu0
  %v721 = vadd.f32 %v320, %v720
  %v722 = vpop.f32.mrb[0].mxu0
  %723 = vdwg.mxu0
  %724 = vmatprep.subr.bf16.mxu0 0
  %725 = vmatpush1.bf16.msra.mxu0 %v129
  %726 = vmatprep.subr.bf16.mxu0 0
  %727 = vmatpush1.bf16.msra.mxu0 %v130
  %728 = vmatprep.subr.bf16.mxu0 0
  %729 = vmatpush1.bf16.msra.mxu0 %v131
  %730 = vmatprep.subr.bf16.mxu0 0
  %731 = vmatpush1.bf16.msra.mxu0 %v132
  %732 = vmatprep.subr.bf16.mxu0 0
  %733 = vmatpush1.bf16.msra.mxu0 %v133
  %734 = vmatprep.subr.bf16.mxu0 0
  %735 = vmatpush1.bf16.msra.mxu0 %v134
  %736 = vmatprep.subr.bf16.mxu0 0
  %737 = vmatpush1.bf16.msra.mxu0 %v135
  %738 = vmatprep.subr.bf16.mxu0 0
  %739 = vmatpush1.bf16.msra.mxu0 %v136
  %740 = vmatprep.subr.bf16.mxu0 0
  %741 = vmatpush1.bf16.msra.mxu0 %v137
  %742 = vmatprep.subr.bf16.mxu0 0
  %743 = vmatpush1.bf16.msra.mxu0 %v138
  %744 = vmatprep.subr.bf16.mxu0 0
  %745 = vmatpush1.bf16.msra.mxu0 %v139
  %746 = vmatprep.subr.bf16.mxu0 0
  %747 = vmatpush1.bf16.msra.mxu0 %v140
  %748 = vmatprep.subr.bf16.mxu0 0
  %749 = vmatpush1.bf16.msra.mxu0 %v141
  %750 = vmatprep.subr.bf16.mxu0 0
  %751 = vmatpush1.bf16.msra.mxu0 %v142
  %752 = vmatprep.subr.bf16.mxu0 0
  %753 = vmatpush1.bf16.msra.mxu0 %v143
  %754 = vmatprep.subr.bf16.mxu0 0
  %755 = vmatpush1.bf16.msra.mxu0 %v144
  %756 = vmatprep.mubr.bf16.mxu0 %v501
  %757 = vmatmul.mubr.bf16.gmra.mrb[0].mxu0 %v500
  %v758 = vpop.f32.mrb[0].mxu0
  %v759 = vadd.f32 %v662, %v758
  %v760 = vpop.f32.mrb[0].mxu0
  %v761 = vpop.f32.mrb[0].mxu0
  %v762 = vadd.f32 %v665, %v761
  %v763 = vpop.f32.mrb[0].mxu0
  %764 = vmatprep.mubr.bf16.mxu0 %v508
  %765 = vmatmul.mubr.bf16.gmra.mrb[0].mxu0 %v507
  %v766 = vpop.f32.mrb[0].mxu0
  %v767 = vadd.f32 %v670, %v766
  %v768 = vpop.f32.mrb[0].mxu0
  %v769 = vpop.f32.mrb[0].mxu0
  %v770 = vadd.f32 %v673, %v769
  %v771 = vpop.f32.mrb[0].mxu0
  %772 = vmatprep.mubr.bf16.mxu0 %v515
  %773 = vmatmul.mubr.bf16.gmra.mrb[0].mxu0 %v514
  %v774 = vpop.f32.mrb[0].mxu0
  %v775 = vadd.f32 %v678, %v774
  %v776 = vpop.f32.mrb[0].mxu0
  %v777 = vpop.f32.mrb[0].mxu0
  %v778 = vadd.f32 %v681, %v777
  %v779 = vpop.f32.mrb[0].mxu0
  %780 = vmatprep.mubr.bf16.mxu0 %v522
  %781 = vmatmul.mubr.bf16.gmra.mrb[0].mxu0 %v521
  %v782 = vpop.f32.mrb[0].mxu0
  %v783 = vadd.f32 %v686, %v782
  %v784 = vpop.f32.mrb[0].mxu0
  %v785 = vpop.f32.mrb[0].mxu0
  %v786 = vadd.f32 %v689, %v785
  %v787 = vpop.f32.mrb[0].mxu0
  %788 = vmatprep.mubr.bf16.mxu0 %v529
  %789 = vmatmul.mubr.bf16.gmra.mrb[0].mxu0 %v528
  %v790 = vpop.f32.mrb[0].mxu0
  %v791 = vadd.f32 %v694, %v790
  %v792 = vpop.f32.mrb[0].mxu0
  %v793 = vpop.f32.mrb[0].mxu0
  %v794 = vadd.f32 %v697, %v793
  %v795 = vpop.f32.mrb[0].mxu0
  %796 = vmatprep.mubr.bf16.mxu0 %v536
  %797 = vmatmul.mubr.bf16.gmra.mrb[0].mxu0 %v535
  %v798 = vpop.f32.mrb[0].mxu0
  %v799 = vadd.f32 %v702, %v798
  %v800 = vpop.f32.mrb[0].mxu0
  %v801 = vpop.f32.mrb[0].mxu0
  %v802 = vadd.f32 %v705, %v801
  %v803 = vpop.f32.mrb[0].mxu0
  %804 = vmatprep.mubr.bf16.mxu0 %v543
  %805 = vmatmul.mubr.bf16.gmra.mrb[0].mxu0 %v542
  %v806 = vpop.f32.mrb[0].mxu0
  %v807 = vadd.f32 %v710, %v806
  %v808 = vpop.f32.mrb[0].mxu0
  %v809 = vpop.f32.mrb[0].mxu0
  %v810 = vadd.f32 %v713, %v809
  %v811 = vpop.f32.mrb[0].mxu0
  %812 = vmatprep.mubr.bf16.mxu0 %v550
  %813 = vmatmul.mubr.bf16.gmra.mrb[0].mxu0 %v549
  %v814 = vpop.f32.mrb[0].mxu0
  %v815 = vadd.f32 %v718, %v814
  %v816 = vpop.f32.mrb[0].mxu0
  %v817 = vpop.f32.mrb[0].mxu0
  %v818 = vadd.f32 %v721, %v817
  %v819 = vpop.f32.mrb[0].mxu0
  %820 = vdwg.mxu0
  %821 = vmatprep.subr.bf16.mxu0 0
  %822 = vmatpush1.bf16.msra.mxu0 %v145
  %823 = vmatprep.subr.bf16.mxu0 0
  %824 = vmatpush1.bf16.msra.mxu0 %v146
  %825 = vmatprep.subr.bf16.mxu0 0
  %826 = vmatpush1.bf16.msra.mxu0 %v147
  %827 = vmatprep.subr.bf16.mxu0 0
  %828 = vmatpush1.bf16.msra.mxu0 %v148
  %829 = vmatprep.subr.bf16.mxu0 0
  %830 = vmatpush1.bf16.msra.mxu0 %v149
  %831 = vmatprep.subr.bf16.mxu0 0
  %832 = vmatpush1.bf16.msra.mxu0 %v150
  %833 = vmatprep.subr.bf16.mxu0 0
  %834 = vmatpush1.bf16.msra.mxu0 %v151
  %835 = vmatprep.subr.bf16.mxu0 0
  %836 = vmatpush1.bf16.msra.mxu0 %v152
  %837 = vmatprep.subr.bf16.mxu0 0
  %838 = vmatpush1.bf16.msra.mxu0 %v153
  %839 = vmatprep.subr.bf16.mxu0 0
  %840 = vmatpush1.bf16.msra.mxu0 %v154
  %841 = vmatprep.subr.bf16.mxu0 0
  %842 = vmatpush1.bf16.msra.mxu0 %v155
  %843 = vmatprep.subr.bf16.mxu0 0
  %844 = vmatpush1.bf16.msra.mxu0 %v156
  %845 = vmatprep.subr.bf16.mxu0 0
  %846 = vmatpush1.bf16.msra.mxu0 %v157
  %847 = vmatprep.subr.bf16.mxu0 0
  %848 = vmatpush1.bf16.msra.mxu0 %v158
  %849 = vmatprep.subr.bf16.mxu0 0
  %850 = vmatpush1.bf16.msra.mxu0 %v159
  %851 = vmatprep.subr.bf16.mxu0 0
  %852 = vmatpush1.bf16.msra.mxu0 %v160
  %853 = vmatprep.mubr.bf16.mxu0 %v503
  %854 = vmatmul.mubr.bf16.gmra.mrb[0].mxu0 %v502
  %v855 = vpop.f32.mrb[0].mxu0
  %v856 = vadd.f32 %v759, %v855
  %v857 = vpop.f32.mrb[0].mxu0
  %v858 = vpop.f32.mrb[0].mxu0
  %v859 = vadd.f32 %v762, %v858
  %v860 = vpop.f32.mrb[0].mxu0
  %861 = vmatprep.mubr.bf16.mxu0 %v510
  %862 = vmatmul.mubr.bf16.gmra.mrb[0].mxu0 %v509
  %v863 = vpop.f32.mrb[0].mxu0
  %v864 = vadd.f32 %v767, %v863
  %v865 = vpop.f32.mrb[0].mxu0
  %v866 = vpop.f32.mrb[0].mxu0
  %v867 = vadd.f32 %v770, %v866
  %v868 = vpop.f32.mrb[0].mxu0
  %869 = vmatprep.mubr.bf16.mxu0 %v517
  %870 = vmatmul.mubr.bf16.gmra.mrb[0].mxu0 %v516
  %v871 = vpop.f32.mrb[0].mxu0
  %v872 = vadd.f32 %v775, %v871
  %v873 = vpop.f32.mrb[0].mxu0
  %v874 = vpop.f32.mrb[0].mxu0
  %v875 = vadd.f32 %v778, %v874
  %v876 = vpop.f32.mrb[0].mxu0
  %877 = vmatprep.mubr.bf16.mxu0 %v524
  %878 = vmatmul.mubr.bf16.gmra.mrb[0].mxu0 %v523
  %v879 = vpop.f32.mrb[0].mxu0
  %v880 = vadd.f32 %v783, %v879
  %v881 = vpop.f32.mrb[0].mxu0
  %v882 = vpop.f32.mrb[0].mxu0
  %v883 = vadd.f32 %v786, %v882
  %v884 = vpop.f32.mrb[0].mxu0
  %885 = vmatprep.mubr.bf16.mxu0 %v531
  %886 = vmatmul.mubr.bf16.gmra.mrb[0].mxu0 %v530
  %v887 = vpop.f32.mrb[0].mxu0
  %v888 = vadd.f32 %v791, %v887
  %v889 = vpop.f32.mrb[0].mxu0
  %v890 = vpop.f32.mrb[0].mxu0
  %v891 = vadd.f32 %v794, %v890
  %v892 = vpop.f32.mrb[0].mxu0
  %893 = vmatprep.mubr.bf16.mxu0 %v538
  %894 = vmatmul.mubr.bf16.gmra.mrb[0].mxu0 %v537
  %v895 = vpop.f32.mrb[0].mxu0
  %v896 = vadd.f32 %v799, %v895
  %v897 = vpop.f32.mrb[0].mxu0
  %v898 = vpop.f32.mrb[0].mxu0
  %v899 = vadd.f32 %v802, %v898
  %v900 = vpop.f32.mrb[0].mxu0
  %901 = vmatprep.mubr.bf16.mxu0 %v545
  %902 = vmatmul.mubr.bf16.gmra.mrb[0].mxu0 %v544
  %v903 = vpop.f32.mrb[0].mxu0
  %v904 = vadd.f32 %v807, %v903
  %v905 = vpop.f32.mrb[0].mxu0
  %v906 = vpop.f32.mrb[0].mxu0
  %v907 = vadd.f32 %v810, %v906
  %v908 = vpop.f32.mrb[0].mxu0
  %909 = vmatprep.mubr.bf16.mxu0 %v552
  %910 = vmatmul.mubr.bf16.gmra.mrb[0].mxu0 %v551
  %v911 = vpop.f32.mrb[0].mxu0
  %v912 = vadd.f32 %v815, %v911
  %v913 = vpop.f32.mrb[0].mxu0
  %v914 = vpop.f32.mrb[0].mxu0
  %v915 = vadd.f32 %v818, %v914
  %v916 = vpop.f32.mrb[0].mxu0
  %917 = vdwg.mxu0
  %918 = vmatprep.subr.bf16.mxu0 0
  %919 = vmatpush1.bf16.msra.mxu0 %v161
  %920 = vmatprep.subr.bf16.mxu0 0
  %921 = vmatpush1.bf16.msra.mxu0 0
  %922 = vmatprep.subr.bf16.mxu0 0
  %923 = vmatpush1.bf16.msra.mxu0 0
  %924 = vmatprep.subr.bf16.mxu0 0
  %925 = vmatpush1.bf16.msra.mxu0 0
  %926 = vmatprep.subr.bf16.mxu0 0
  %927 = vmatpush1.bf16.msra.mxu0 0
  %928 = vmatprep.subr.bf16.mxu0 0
  %929 = vmatpush1.bf16.msra.mxu0 0
  %930 = vmatprep.subr.bf16.mxu0 0
  %931 = vmatpush1.bf16.msra.mxu0 0
  %932 = vmatprep.subr.bf16.mxu0 0
  %933 = vmatpush1.bf16.msra.mxu0 0
  %934 = vmatprep.subr.bf16.mxu0 0
  %935 = vmatpush1.bf16.msra.mxu0 0
  %936 = vmatprep.subr.bf16.mxu0 0
  %937 = vmatpush1.bf16.msra.mxu0 0
  %938 = vmatprep.subr.bf16.mxu0 0
  %939 = vmatpush1.bf16.msra.mxu0 0
  %940 = vmatprep.subr.bf16.mxu0 0
  %941 = vmatpush1.bf16.msra.mxu0 0
  %942 = vmatprep.subr.bf16.mxu0 0
  %943 = vmatpush1.bf16.msra.mxu0 0
  %944 = vmatprep.subr.bf16.mxu0 0
  %945 = vmatpush1.bf16.msra.mxu0 0
  %946 = vmatprep.subr.bf16.mxu0 0
  %947 = vmatpush1.bf16.msra.mxu0 0
  %948 = vmatprep.subr.bf16.mxu0 0
  %949 = vmatpush1.bf16.msra.mxu0 0
  %950 = vmatprep.mubr.bf16.mxu0 0
  %951 = vmatmul.mubr.bf16.gmra.mrb[0].mxu0 %v604
  %v952 = vpop.f32.mrb[0].mxu0
  %v953 = vadd.f32 %v856, %v952
  %v954 = vpop.f32.mrb[0].mxu0
  %v955 = vpop.f32.mrb[0].mxu0
  %v956 = vadd.f32 %v859, %v955
  %v957 = vpop.f32.mrb[0].mxu0
  %958 = vmatprep.mubr.bf16.mxu0 0
  %959 = vmatmul.mubr.bf16.gmra.mrb[0].mxu0 %v607
  %v960 = vpop.f32.mrb[0].mxu0
  %v961 = vadd.f32 %v864, %v960
  %v962 = vpop.f32.mrb[0].mxu0
  %v963 = vpop.f32.mrb[0].mxu0
  %v964 = vadd.f32 %v867, %v963
  %v965 = vpop.f32.mrb[0].mxu0
  %966 = vmatprep.mubr.bf16.mxu0 0
  %967 = vmatmul.mubr.bf16.gmra.mrb[0].mxu0 %v610
  %v968 = vpop.f32.mrb[0].mxu0
  %v969 = vadd.f32 %v872, %v968
  %v970 = vpop.f32.mrb[0].mxu0
  %v971 = vpop.f32.mrb[0].mxu0
  %v972 = vadd.f32 %v875, %v971
  %v973 = vpop.f32.mrb[0].mxu0
  %974 = vmatprep.mubr.bf16.mxu0 0
  %975 = vmatmul.mubr.bf16.gmra.mrb[0].mxu0 %v613
  %v976 = vpop.f32.mrb[0].mxu0
  %v977 = vadd.f32 %v880, %v976
  %v978 = vpop.f32.mrb[0].mxu0
  %v979 = vpop.f32.mrb[0].mxu0
  %v980 = vadd.f32 %v883, %v979
  %v981 = vpop.f32.mrb[0].mxu0
  %982 = vmatprep.mubr.bf16.mxu0 0
  %983 = vmatmul.mubr.bf16.gmra.mrb[0].mxu0 %v616
  %v984 = vpop.f32.mrb[0].mxu0
  %v985 = vadd.f32 %v888, %v984
  %v986 = vpop.f32.mrb[0].mxu0
  %v987 = vpop.f32.mrb[0].mxu0
  %v988 = vadd.f32 %v891, %v987
  %v989 = vpop.f32.mrb[0].mxu0
  %990 = vmatprep.mubr.bf16.mxu0 0
  %991 = vmatmul.mubr.bf16.gmra.mrb[0].mxu0 %v619
  %v992 = vpop.f32.mrb[0].mxu0
  %v993 = vadd.f32 %v896, %v992
  %v994 = vpop.f32.mrb[0].mxu0
  %v995 = vpop.f32.mrb[0].mxu0
  %v996 = vadd.f32 %v899, %v995
  %v997 = vpop.f32.mrb[0].mxu0
  %998 = vmatprep.mubr.bf16.mxu0 0
  %999 = vmatmul.mubr.bf16.gmra.mrb[0].mxu0 %v622
  %v1000 = vpop.f32.mrb[0].mxu0
  %v1001 = vadd.f32 %v904, %v1000
  %v1002 = vpop.f32.mrb[0].mxu0
  %v1003 = vpop.f32.mrb[0].mxu0
  %v1004 = vadd.f32 %v907, %v1003
  %v1005 = vpop.f32.mrb[0].mxu0
  %1006 = vmatprep.mubr.bf16.mxu0 0
  %1007 = vmatmul.mubr.bf16.gmra.mrb[0].mxu0 %v625
  %v1008 = vpop.f32.mrb[0].mxu0
  %v1009 = vadd.f32 %v912, %v1008
  %v1010 = vpop.f32.mrb[0].mxu0
  %v1011 = vpop.f32.mrb[0].mxu0
  %v1012 = vadd.f32 %v915, %v1011
  %v1013 = vpop.f32.mrb[0].mxu0
  %1014 = vdwg.mxu0
  %vm1015 = vcmask 15360
  %1016 = vst.msk [vmem:[%s3] sm:$0xff] %vm1015, %v953
  %1017 = vst.msk [vmem:[%s3 + $0x8] sm:$0xff] %vm1015, %v956
  %1018 = vst.msk [vmem:[%s3 + $0x10] sm:$0xff] %vm1015, %v961
  %1019 = vst.msk [vmem:[%s3 + $0x18] sm:$0xff] %vm1015, %v964
  %1020 = vst.msk [vmem:[%s3 + $0x20] sm:$0xff] %vm1015, %v969
  %1021 = vst.msk [vmem:[%s3 + $0x28] sm:$0xff] %vm1015, %v972
  %1022 = vst.msk [vmem:[%s3 + $0x30] sm:$0xff] %vm1015, %v977
  %1023 = vst.msk [vmem:[%s3 + $0x38] sm:$0xff] %vm1015, %v980
  %1024 = vst.msk [vmem:[%s3 + $0x40] sm:$0xff] %vm1015, %v985
  %1025 = vst.msk [vmem:[%s3 + $0x48] sm:$0xff] %vm1015, %v988
  %1026 = vst.msk [vmem:[%s3 + $0x50] sm:$0xff] %vm1015, %v993
  %1027 = vst.msk [vmem:[%s3 + $0x58] sm:$0xff] %vm1015, %v996
  %1028 = vst.msk [vmem:[%s3 + $0x60] sm:$0xff] %vm1015, %v1001
  %1029 = vst.msk [vmem:[%s3 + $0x68] sm:$0xff] %vm1015, %v1004
  %1030 = vst.msk [vmem:[%s3 + $0x70] sm:$0xff] %vm1015, %v1009
  %1031 = vst.msk [vmem:[%s3 + $0x78] sm:$0xff] %vm1015, %v1012
  // Predicated region
  $region14: #{_lambda_.1} parent=0 // pred_check
    _
  $region15: #{_lambda_.1} parent=0 // pred_check_branch
    %1033 = sbr.rel (0) target = $region17
  $region16: #{_lambda_.1} parent=0 // pred_region
    _
  $region17: #{_lambda_.1} parent=0 // pred_fallthru
    _
  // Predicated region
  $region18: #{_lambda_.1} parent=0 // pred_check
    _
  $region19: #{_lambda_.1} parent=0 // pred_check_branch
    %1035 = sbr.rel (0) target = $region21
  $region20: #{_lambda_.1} parent=0 // pred_region
    _
  $region21: #{_lambda_.1} parent=0 // pred_fallthru
    _

</llo_original>
